<compile_context>
chip_gen: v6e
topology: v6e:2x2x1
jax: 0.10.0
libtpu: 0.0.40
codegen_flags: <defaults>
</compile_context>

<pallas_src>
import functools

import jax
import jax.numpy as jnp
from jax.experimental import pallas as pl
from jax.experimental.pallas import tpu as pltpu

HID_SIZE = 128


def _critic_kernel(x_ref, w1_ref, b1_ref, w2_ref, b2_ref, o_ref, *, compute_dtype):
    # x_ref:  (TM, obs)            input dtype (f32 or bf16, straight from HBM)
    # w1_ref: (obs, HID)           compute_dtype (pre-cast once in the wrapper)
    # b1_ref: (1, HID) f32 | w2_ref: (1, HID) f32 | b2_ref: (1, 1) f32 in SMEM
    # o_ref:  (1, TM) f32          lane-dense output row
    x = x_ref[...]
    if x.dtype != compute_dtype:
        x = x.astype(compute_dtype)            # in-kernel cast (no extra HBM pass)
    # First layer on the MXU, f32 accumulation; bias add + ReLU on the VPU in f32.
    h = jnp.dot(x, w1_ref[...], preferred_element_type=jnp.float32) + b1_ref[...]
    h = jnp.maximum(h, 0.0)
    # Second layer (HID -> 1): VPU multiply + XLU lane reduction instead of a
    # (TM,128)@(128,1) matmul.
    # TODO(synk): if bundle dumps show XLU/vex as the binding slot at large TM on
    # v6e/v7x, move this GEMV back onto the (mostly idle) MXU instead.
    v = jnp.sum(h * w2_ref[...], axis=-1) + b2_ref[0, 0]   # (TM,) f32
    o_ref[...] = v[None, :].astype(o_ref.dtype)            # lane-dense (1, TM) row


def _round_up(v, m):
    return ((v + m - 1) // m) * m


def _pick_tm(batch, obs, itemsize):
    """Batch-tile rows: ~1 MiB of raw x per block, >=2 tiles when B>512 (v7x TCs)."""
    if batch <= 512:
        return batch
    # ~1 MiB of raw x HBM bytes per block, capped at 8192 rows so the lane-padded
    # VMEM footprint (obs padded to 128 lanes, x2 double buffers, + f32 temps) stays
    # comfortably under the vmem limit below on all generations.
    target = max(512, min((1 << 20) // (itemsize * obs), 8192))
    half = pl.cdiv(batch, 2)          # keep >= 2 tiles for the v7x dual TensorCores
    return _round_up(min(target, half), 8)


def critic_forward(x, w1, b1, w2, b2, *, compute_dtype=None, tm=None):
    """x: (B, obs_size) f32 or bf16 -> (B, 1) f32, matching Linear -> ReLU -> Linear.

    Feed bf16 x straight from the producer to halve HBM traffic; accumulation is f32
    either way. No wrapper-side cast of x is performed (that would be a wasted pass).
    """
    B, obs_size = x.shape
    hid = w1.shape[1]
    if compute_dtype is None:
        compute_dtype = x.dtype

    w1_c = w1.astype(compute_dtype)       # tiny (obs x HID); cast once, VMEM-resident
    b1_2d = b1.reshape(1, hid).astype(jnp.float32)
    w2_row = w2.reshape(1, hid).astype(jnp.float32)   # (HID,1) -> lane-dense (1,HID)
    b2_2d = b2.reshape(1, 1).astype(jnp.float32)

    if tm is None:
        tm = _pick_tm(B, obs_size, jnp.dtype(x.dtype).itemsize)
    ntiles = pl.cdiv(B, tm)

    kernel = functools.partial(_critic_kernel, compute_dtype=compute_dtype)
    out_padded = pl.pallas_call(
        kernel,
        # Lane-dense output: one (1, tm) row per grid step -> wide unmasked stores,
        # reshaped back to (B, 1) in the wrapper (contiguous reshape + slice, free).
        out_shape=jax.ShapeDtypeStruct((ntiles, tm), jnp.float32),
        grid=(ntiles,),
        in_specs=[
            pl.BlockSpec((tm, obs_size), lambda i: (i, 0)),      # x: streamed over batch
            pl.BlockSpec((obs_size, hid), lambda i: (0, 0)),     # w1: VMEM-resident
            pl.BlockSpec((1, hid), lambda i: (0, 0)),            # b1: VMEM-resident
            pl.BlockSpec((1, hid), lambda i: (0, 0)),            # w2 row: VMEM-resident
            pl.BlockSpec(memory_space=pltpu.MemorySpace.SMEM),   # b2: scalar in SMEM
        ],
        out_specs=pl.BlockSpec((1, tm), lambda i: (i, 0)),
        compiler_params=pltpu.CompilerParams(
            dimension_semantics=("parallel",),   # v7x: shard batch tiles across both TCs
            # Headroom for 8192-row tiles (x double-buffers + f32 temporaries);
            # stays below v7x's 64 MiB physical VMEM.
            vmem_limit_bytes=48 * 1024 * 1024,
        ),
    )(x, w1_c, b1_2d, w2_row, b2_2d)

    # Padded rows (B % tm != 0) are independent garbage; slice them off.
    return out_padded.reshape(ntiles * tm, 1)[:B]


def init_critic_params(key, obs_size):
    """Deterministic init mirroring torch.nn.Linear default (uniform +-1/sqrt(fan_in))."""
    k1, k2, k3, k4 = jax.random.split(key, 4)
    bound1 = 1.0 / jnp.sqrt(obs_size)
    bound2 = 1.0 / jnp.sqrt(HID_SIZE)
    w1 = jax.random.uniform(k1, (obs_size, HID_SIZE), jnp.float32, -bound1, bound1)
    b1 = jax.random.uniform(k2, (HID_SIZE,), jnp.float32, -bound1, bound1)
    w2 = jax.random.uniform(k3, (HID_SIZE, 1), jnp.float32, -bound2, bound2)
    b2 = jax.random.uniform(k4, (1,), jnp.float32, -bound2, bound2)
    return w1, b1, w2, b2


def _reference(x, w1, b1, w2, b2):
    h = jnp.maximum(x @ w1 + b1, 0.0)
    return (h * w2.reshape(1, -1)).sum(axis=-1, keepdims=True) + b2


if __name__ == "__main__":
    key = jax.random.PRNGKey(0)
    kx, kp, k2, k3 = jax.random.split(key, 4)

    # Small standalone case matching the module: B=8 envs, obs_size=32, pure f32 path.
    B, OBS = 8, 32
    x = jax.random.normal(kx, (B, OBS), jnp.float32)
    w1, b1, w2, b2 = init_critic_params(kp, OBS)

    out = jax.block_until_ready(critic_forward(x, w1, b1, w2, b2))
    ref = _reference(x, w1, b1, w2, b2)
    assert out.shape == (B, 1)
    assert jnp.allclose(out, ref, atol=1e-5, rtol=1e-5)

    # Non-multiple batch: exercises the 2-tile grid, the partial last tile and the
    # lane-dense output reshape/slice path.
    B2 = 1000
    x2 = jax.random.normal(k2, (B2, OBS), jnp.float32)
    out2 = jax.block_until_ready(critic_forward(x2, w1, b1, w2, b2))
    ref2 = _reference(x2, w1, b1, w2, b2)
    assert out2.shape == (B2, 1)
    assert jnp.allclose(out2, ref2, atol=1e-4, rtol=1e-4)

    # Rollout-sized batch with bf16 x produced "upstream" (no wrapper astype):
    # bf16 MXU inputs, f32 accumulation/elementwise, loose tolerance vs f32 reference.
    B3 = 4096
    x3 = jax.random.normal(k3, (B3, OBS), jnp.float32).astype(jnp.bfloat16)
    out3 = jax.block_until_ready(critic_forward(x3, w1, b1, w2, b2))
    ref3 = _reference(x3.astype(jnp.float32), w1, b1, w2, b2)
    assert out3.shape == (B3, 1)
    assert jnp.allclose(out3, ref3, atol=5e-2, rtol=5e-2)

    print("KERNEL_OK")
</pallas_src>

<mosaic_0001>
module attributes {stable_mosaic.version = 11 : i64} {
  func.func @_critic_kernel(%arg0: i32, %arg1: memref<8x32xf32, #tpu.memory_space<vmem>>, %arg2: memref<32x128xf32, #tpu.memory_space<vmem>>, %arg3: memref<1x128xf32, #tpu.memory_space<vmem>>, %arg4: memref<1x128xf32, #tpu.memory_space<vmem>>, %arg5: memref<1x1xf32, #tpu.memory_space<smem>>, %arg6: memref<1x8xf32, #tpu.memory_space<vmem>>) attributes {dimension_semantics = [#tpu.dimension_semantics<parallel>], iteration_bounds = array<i64: 1>, scalar_prefetch = 0 : i64, scratch_operands = 0 : i64, tpu.core_type = #tpu.core_type<tc>, window_params = [{transform_indices = @transform_0, window_bounds = array<i64: 8, 32>}, {pipeline_mode = #tpu.pipeline_mode<synchronous>, transform_indices = @transform_1, window_bounds = array<i64: 32, 128>}, {pipeline_mode = #tpu.pipeline_mode<synchronous>, transform_indices = @transform_2, window_bounds = array<i64: 1, 128>}, {pipeline_mode = #tpu.pipeline_mode<synchronous>, transform_indices = @transform_3, window_bounds = array<i64: 1, 128>}, {transform_indices = @transform_4, window_bounds = array<i64: 1, 1>}, {transform_indices = @transform_5, window_bounds = array<i64: 1, 8>}]} {
    %c0 = arith.constant 0 : index
    %c0_0 = arith.constant 0 : index
    %0 = vector.load %arg1[%c0, %c0_0] : memref<8x32xf32, #tpu.memory_space<vmem>>, vector<8x32xf32>
    %c0_1 = arith.constant 0 : index
    %c0_2 = arith.constant 0 : index
    %1 = vector.load %arg2[%c0_1, %c0_2] : memref<32x128xf32, #tpu.memory_space<vmem>>, vector<32x128xf32>
    %cst = arith.constant dense<0.000000e+00> : vector<8x128xf32>
    %2 = tpu.matmul %0, %1, %cst {dimension_numbers = #tpu.dot_dimension_numbers<[1], [0], [0], [1], [0, 0, 1, 1], [], []>} : vector<8x32xf32>, vector<32x128xf32>, vector<8x128xf32> -> vector<8x128xf32>
    %c0_3 = arith.constant 0 : index
    %c0_4 = arith.constant 0 : index
    %3 = vector.load %arg3[%c0_3, %c0_4] : memref<1x128xf32, #tpu.memory_space<vmem>>, vector<1x128xf32>
    %4 = vector.broadcast %3 : vector<1x128xf32> to vector<8x128xf32>
    %5 = arith.addf %2, %4 : vector<8x128xf32>
    %cst_5 = arith.constant 0.000000e+00 : f32
    %6 = vector.broadcast %cst_5 : f32 to vector<8x128xf32>
    %7 = arith.maximumf %5, %6 : vector<8x128xf32>
    %c0_6 = arith.constant 0 : index
    %c0_7 = arith.constant 0 : index
    %8 = vector.load %arg4[%c0_6, %c0_7] : memref<1x128xf32, #tpu.memory_space<vmem>>, vector<1x128xf32>
    %9 = vector.broadcast %8 : vector<1x128xf32> to vector<8x128xf32>
    %10 = arith.mulf %7, %9 : vector<8x128xf32>
    %cst_8 = arith.constant dense<0.000000e+00> : vector<8xf32>
    %11 = vector.multi_reduction <add>, %10, %cst_8 [1] : vector<8x128xf32> to vector<8xf32>
    %c0_9 = arith.constant 0 : index
    %c0_10 = arith.constant 0 : index
    %12 = memref.load %arg5[%c0_9, %c0_10] : memref<1x1xf32, #tpu.memory_space<smem>>
    %13 = vector.broadcast %12 : f32 to vector<8xf32>
    %14 = arith.addf %11, %13 : vector<8xf32>
    %15 = vector.shape_cast %14 : vector<8xf32> to vector<1x8xf32>
    %c0_11 = arith.constant 0 : index
    %c0_12 = arith.constant 0 : index
    %16 = vector.load %arg6[%c0_11, %c0_12] : memref<1x8xf32, #tpu.memory_space<vmem>>, vector<1x8xf32>
    tpu.vector_store %arg6[%c0_11, %c0_12], %15 {strides = array<i32>} : memref<1x8xf32, #tpu.memory_space<vmem>>, vector<1x8xf32>,
    return
  }
  func.func @transform_0(%arg0: i32) -> (i32, i32) {
    %c0_i32 = arith.constant 0 : i32
    %c0_i32_0 = arith.constant 0 : i32
    return %arg0, %c0_i32 : i32, i32
  }
  func.func @transform_1(%arg0: i32) -> (i32, i32) {
    %c0_i32 = arith.constant 0 : i32
    %c0_i32_0 = arith.constant 0 : i32
    %c0_i32_1 = arith.constant 0 : i32
    return %c0_i32, %c0_i32_0 : i32, i32
  }
  func.func @transform_2(%arg0: i32) -> (i32, i32) {
    %c0_i32 = arith.constant 0 : i32
    %c0_i32_0 = arith.constant 0 : i32
    %c0_i32_1 = arith.constant 0 : i32
    return %c0_i32, %c0_i32_0 : i32, i32
  }
  func.func @transform_3(%arg0: i32) -> (i32, i32) {
    %c0_i32 = arith.constant 0 : i32
    %c0_i32_0 = arith.constant 0 : i32
    %c0_i32_1 = arith.constant 0 : i32
    return %c0_i32, %c0_i32_0 : i32, i32
  }
  func.func @transform_4(%arg0: i32) -> (i32, i32) {
    %c0_i32 = arith.constant 0 : i32
    %c0_i32_0 = arith.constant 0 : i32
    %c0_i32_1 = arith.constant 0 : i32
    return %c0_i32, %c0_i32_0 : i32, i32
  }
  func.func @transform_5(%arg0: i32) -> (i32, i32) {
    %c0_i32 = arith.constant 0 : i32
    %c0_i32_0 = arith.constant 0 : i32
    return %arg0, %c0_i32 : i32, i32
  }
}

</mosaic_0001>

<llo_original>
// kernel: tpu_custom_call.1
$region0: #{tpu_custom_call.1}
  #allocation0 [shape = 'u32[]', space=smem, size = 0x4, offset = 0x4, fixed_abs, tag = 'smem constant byte address 0x4 - core index']
  #allocation1 [shape = 'u32[144,128]{1,0:T(1,128)}', space=vmem, size = 0x12000, scoped, tag = 'internal scratch']
  #allocation2 [shape = 'f32[1,1]{1,0:T(1,128)S(6)}', space=smem, size = 0x200, scoped, tag = 'scoped memory for tpu_custom_call.1']
  %s0 = inlined_call_operand.hbm [shape: f32[8,32], index: 0, kind: input, shape index: {}]
  %s1 = inlined_call_operand.hbm [shape: f32[32,128], index: 1, kind: input, shape index: {}]
  %s2 = inlined_call_operand.vmem [shape: f32[1,128], index: 2, kind: input, shape index: {}]
  %s3 = inlined_call_operand.vmem [shape: f32[1,128], index: 3, kind: input, shape index: {}]
  %s4 = inlined_call_operand.<no memory space> [shape: f32[1,1], index: 4, kind: input, shape index: {}]
  %s5 = inlined_call_operand.hbm [shape: f32[1,8], index: 5, kind: output, shape index: {}]
  %s6 = sld [smem:[#allocation0]]
  $region38: #{tpu_custom_call.1} parent=0
    _
  %s8 = ssub.s32 1, %s6
  %s9 = scalar_select 0, %s8, %s6
  %10 = sst [smem:[#allocation2]] %s4
  $region1: #{tpu_custom_call.1} parent=0
    #allocation3 [shape = 'u8[4096]{0}', space=vmem, size = 0x1000, scoped, tag = 'input window, operand 0, single buffered']
    #allocation4 [shape = 's32[1]{0}', space=sflag, size = 0x4, scoped, tag = 'scoped memory for tpu_custom_call.1']
    #allocation5 [shape = 's32[1]{0}', space=sflag, size = 0x4, scoped, tag = 'scoped memory for tpu_custom_call.1']
    #allocation6 [shape = 'u8[16384]{0}', space=vmem, size = 0x4000, scoped, tag = 'input window, operand 1, single buffered']
    #allocation7 [shape = 's32[1]{0}', space=sflag, size = 0x4, scoped, tag = 'scoped memory for tpu_custom_call.1']
    #allocation8 [shape = 'u8[512]{0}', space=vmem, size = 0x400, scoped, tag = 'output window, operand 0, single buffered']
    %11 = vsyncpa [#allocation4], 0
    %12 = vsyncpa [#allocation7], 0
    %13 = vsyncpa [#allocation5], 0
    // Predicated region
    $region2: #{tpu_custom_call.1} parent=1 // pred_check
      _
    $region3: #{tpu_custom_call.1} parent=1 // pred_check_branch
      %15 = sbr.rel (0) target = $region5
    $region4: #{tpu_custom_call.1} parent=1 // pred_region
      %s17 = ssub.s32 128, 128
      %18 = vsyncadd [#allocation4], %s17
      %s20 = sshll.u32 [#allocation3], 4
      %s21 = int_to_ptr.vmem [resolvable:$true] %s20
      %23 = dma.hbm_to_vmem [thread:$0]  %s0, 128, %s21, [#allocation4]
    $region5: #{tpu_custom_call.1} parent=1 // pred_fallthru
      _
    // Predicated region
    $region6: #{tpu_custom_call.1} parent=1 // pred_check
      _
    $region7: #{tpu_custom_call.1} parent=1 // pred_check_branch
      %25 = sbr.rel (0) target = $region9
    $region8: #{tpu_custom_call.1} parent=1 // pred_region
      %s27 = ssub.s32 512, 512
      %28 = vsyncadd [#allocation7], %s27
      %s29 = sshll.u32 [#allocation6], 4
      %s30 = int_to_ptr.vmem [resolvable:$true] %s29
      %35 = dma.hbm_to_vmem [thread:$0]  %s1, 512, %s30, [#allocation7], 128, 128, 8
    $region9: #{tpu_custom_call.1} parent=1 // pred_fallthru
      _
    // Predicated region
    $region10: #{tpu_custom_call.1} parent=1 // pred_check
      _
    $region11: #{tpu_custom_call.1} parent=1 // pred_check_branch
      %37 = sbr.rel (0) target = $region13
    $region12: #{tpu_custom_call.1} parent=1 // pred_region
      _
    $region13: #{tpu_custom_call.1} parent=1 // pred_fallthru
      _
    // Predicated region
    $region14: #{tpu_custom_call.1} parent=1 // pred_check
      _
    $region15: #{tpu_custom_call.1} parent=1 // pred_check_branch
      %39 = sbr.rel (0) target = $region17
    $region16: #{tpu_custom_call.1} parent=1 // pred_region
      _
    $region17: #{tpu_custom_call.1} parent=1 // pred_fallthru
      _
    // Predicated region
    $region18: #{tpu_custom_call.1} parent=1 // pred_check
      _
    $region19: #{tpu_custom_call.1} parent=1 // pred_check_branch
      %41 = sbr.rel (0) target = $region21
    $region20: #{tpu_custom_call.1} parent=1 // pred_region
      _
    $region21: #{tpu_custom_call.1} parent=1 // pred_fallthru
      _
    // Predicated region
    $region22: #{tpu_custom_call.1} parent=1 // pred_check
      _
    $region23: #{tpu_custom_call.1} parent=1 // pred_check_branch
      %43 = sbr.rel (0) target = $region25
    $region24: #{tpu_custom_call.1} parent=1 // pred_region
      %44 = dma.done [#allocation4], 128
    $region25: #{tpu_custom_call.1} parent=1 // pred_fallthru
      _
    // Predicated region
    $region26: #{tpu_custom_call.1} parent=1 // pred_check
      _
    $region27: #{tpu_custom_call.1} parent=1 // pred_check_branch
      %46 = sbr.rel (0) target = $region29
    $region28: #{tpu_custom_call.1} parent=1 // pred_region
      %47 = dma.done [#allocation7], 512
    $region29: #{tpu_custom_call.1} parent=1 // pred_fallthru
      _
    %v48 = vld [vmem:[#allocation3] sm:$0xff]
    %v49 = vld [vmem:[#allocation6] sm:$0xff]
    %v50 = vld [vmem:[#allocation6 + $0x8] sm:$0xff]
    %v51 = vld [vmem:[#allocation6 + $0x10] sm:$0xff]
    %v52 = vld [vmem:[#allocation6 + $0x18] sm:$0xff]
    %v53 = vld [vmem:[%s2] sm:$0x1]
    %v55 = vlaneseq
    %v56 = vshrl.u32 %v55, 7
    %v57 = vsub.s32 0, %v56
    %v58 = vrot.slane %v53, %v57
    %vm60 = vcmask 261120
    %v62 = vsel %vm60, %v48, 0
    %64 = vmatprep.subr.mxu0 0.0
    %65 = vmatpush1.msra.mxu0 0.0
    %66 = vmatprep.subr.mxu0 0.0
    %67 = vmatpush1.msra.mxu0 0.0
    %68 = vmatprep.subr.mxu0 0.0
    %69 = vmatpush1.msra.mxu0 0.0
    %70 = vmatprep.subr.mxu0 0.0
    %71 = vmatpush1.msra.mxu0 0.0
    %72 = vmatprep.subr.mxu0 0.0
    %73 = vmatpush1.msra.mxu0 0.0
    %74 = vmatprep.subr.mxu0 0.0
    %75 = vmatpush1.msra.mxu0 0.0
    %76 = vmatprep.subr.mxu0 0.0
    %77 = vmatpush1.msra.mxu0 0.0
    %78 = vmatprep.subr.mxu0 0.0
    %79 = vmatpush1.msra.mxu0 0.0
    %80 = vmatprep.subr.mxu0 0.0
    %81 = vmatpush1.msra.mxu0 0.0
    %82 = vmatprep.subr.mxu0 0.0
    %83 = vmatpush1.msra.mxu0 0.0
    %84 = vmatprep.subr.mxu0 0.0
    %85 = vmatpush1.msra.mxu0 0.0
    %86 = vmatprep.subr.mxu0 0.0
    %87 = vmatpush1.msra.mxu0 0.0
    %88 = vmatprep.subr.mxu0 0.0
    %89 = vmatpush1.msra.mxu0 %v52
    %90 = vmatprep.subr.mxu0 0.0
    %91 = vmatpush1.msra.mxu0 %v51
    %92 = vmatprep.subr.mxu0 0.0
    %93 = vmatpush1.msra.mxu0 %v50
    %94 = vmatprep.subr.mxu0 0.0
    %95 = vmatpush1.msra.mxu0 %v49
    %96 = vmatprep.subr.mxu0 0.0
    %97 = vmatpush2.msra.mxu0 0.0
    %98 = vmatprep.subr.mxu0 0.0
    %99 = vmatpush2.msra.mxu0 0.0
    %100 = vmatprep.subr.mxu0 0.0
    %101 = vmatpush2.msra.mxu0 0.0
    %102 = vmatprep.subr.mxu0 0.0
    %103 = vmatpush2.msra.mxu0 0.0
    %104 = vmatprep.subr.mxu0 0.0
    %105 = vmatpush2.msra.mxu0 0.0
    %106 = vmatprep.subr.mxu0 0.0
    %107 = vmatpush2.msra.mxu0 0.0
    %108 = vmatprep.subr.mxu0 0.0
    %109 = vmatpush2.msra.mxu0 0.0
    %110 = vmatprep.subr.mxu0 0.0
    %111 = vmatpush2.msra.mxu0 0.0
    %112 = vmatprep.subr.mxu0 0.0
    %113 = vmatpush2.msra.mxu0 0.0
    %114 = vmatprep.subr.mxu0 0.0
    %115 = vmatpush2.msra.mxu0 0.0
    %116 = vmatprep.subr.mxu0 0.0
    %117 = vmatpush2.msra.mxu0 0.0
    %118 = vmatprep.subr.mxu0 0.0
    %119 = vmatpush2.msra.mxu0 0.0
    %120 = vmatprep.subr.mxu0 0.0
    %121 = vmatpush2.msra.mxu0 0.0
    %122 = vmatprep.subr.mxu0 0.0
    %123 = vmatpush2.msra.mxu0 0.0
    %124 = vmatprep.subr.mxu0 0.0
    %125 = vmatpush2.msra.mxu0 0.0
    %126 = vmatprep.subr.mxu0 0.0
    %127 = vmatpush2.msra.mxu0 0.0
    %128 = vmatprep.mubr.f32.mxu0 0.0
    %129 = vmatmul.mubr.f32.gmra.mxu0 %v62
    %v130 = vpop.f32.mrf.mxu0
    %v131 = vadd.f32 %v58, %v130
    %v132 = vpop.f32.mrf.mxu0
    %133 = vdwg.mxu0
    %v134 = vmax.f32 %v131, 0.0
    %v135 = vld [vmem:[%s3] sm:$0x1]
    %v137 = vlaneseq
    %v138 = vshrl.u32 %v137, 7
    %v139 = vsub.s32 0, %v138
    %v140 = vrot.slane %v135, %v139
    %v142 = vmul.f32 %v134, %v140
    %143 = vadd.xlane.f32.xlu0 %v142
    %v144 = vpop.xlane.xlu0 %143
    %s145 = sld [smem:[#allocation2]]
    %v146 = vstv %s145
    %v147 = vadd.f32 %v144, %v146
    %v149 = vlaneseq
    %v150 = vand.u32 %v149, 127
    %v151 = vlaneseq
    %v152 = vshrl.u32 %v151, 7
    %v153 = vsub.s32 %v150, %v152
    %v154 = vrot.slane %v147, %v153
    %vm156 = vcmask 57344
    %157 = vst.msk [vmem:[#allocation8] sm:$0x1] %vm156, %v154
    // Predicated region
    $region30: #{tpu_custom_call.1} parent=1 // pred_check
      _
    $region31: #{tpu_custom_call.1} parent=1 // pred_check_branch
      %159 = sbr.rel (0) target = $region33
    $region32: #{tpu_custom_call.1} parent=1 // pred_region
      %s161 = ssub.s32 16, 16
      %162 = vsyncadd [#allocation5], %s161
      %s164 = sshll.u32 [#allocation8], 4
      %s165 = int_to_ptr.vmem [resolvable:$true] %s164
      %167 = dma.vmem_to_hbm [thread:$0]  %s165, 16, %s5, [#allocation5]
    $region33: #{tpu_custom_call.1} parent=1 // pred_fallthru
      _
    // Predicated region
    $region34: #{tpu_custom_call.1} parent=1 // pred_check
      _
    $region35: #{tpu_custom_call.1} parent=1 // pred_check_branch
      %169 = sbr.rel (0) target = $region37
    $region36: #{tpu_custom_call.1} parent=1 // pred_region
      %170 = dma.done [#allocation5], 16
    $region37: #{tpu_custom_call.1} parent=1 // pred_fallthru
      _
    %171 = vsyncpa [#allocation4], 1
    %172 = vsyncpa [#allocation7], 1
    %173 = vsyncpa [#allocation5], 1

</llo_original>
